<compile_context>
chip_gen: v6e
topology: v6e:2x2x1
jax: 0.10.0
libtpu: 0.0.40
codegen_flags: <defaults>
</compile_context>

<pallas_src>
import functools

import jax
import jax.numpy as jnp
from jax.experimental import pallas as pl
from jax.experimental.pallas import tpu as pltpu


def _focal_loss_kernel(n_ref, x_ref, lbl_ref, out_ref, *,
                       alpha: float, gamma: float, tile_rows: int):
    """One (TILE_ROWS, C) tile of the native (N, C) layout; classes on lanes."""
    i = pl.program_id(0)

    @pl.when(i == 0)
    def _init():
        out_ref[...] = jnp.zeros_like(out_ref)

    x = x_ref[...].astype(jnp.float32)        # (T, C) logits
    lbl = lbl_ref[...].astype(jnp.float32)    # (T, C) label scores
    t, c = x.shape

    # Rows past the true batch size (ragged / OOB last tile) hold unspecified data.
    # Zero them BEFORE any transcendental so no inf/NaN can be produced.
    row = i * tile_rows + jax.lax.broadcasted_iota(jnp.int32, (t, 1), 0)
    valid = row < n_ref[0]                    # (T, 1)
    x = jnp.where(valid, x, 0.0)
    lbl = jnp.where(valid, lbl, 0.0)

    # target = argmax(label, axis=1), first-max tie-break (matches torch.argmax).
    cls = jax.lax.broadcasted_iota(jnp.int32, (t, c), 1)
    lbl_max = jnp.max(lbl, axis=1, keepdims=True)
    idx = jnp.min(jnp.where(lbl == lbl_max, cls, c), axis=1, keepdims=True)

    # Numerically stable log-softmax; gather the target logit first so only the
    # softmax denominator is O(T*C) transcendentals, everything else is O(T).
    m = jnp.max(x, axis=1, keepdims=True)                       # (T, 1)
    shifted = x - m                                             # (T, C)
    s = jnp.sum(jnp.exp(shifted), axis=1, keepdims=True)        # (T, 1)
    x_t = jnp.sum(jnp.where(cls == idx, shifted, 0.0),
                  axis=1, keepdims=True)                        # (T, 1)
    log_p_t = x_t - jnp.log(s)                                  # (T, 1)
    p_t = jnp.exp(log_p_t)                                      # (T, 1)

    # Clamp guards p_t marginally exceeding 1 from rounding (documented deviation).
    om = jnp.maximum(1.0 - p_t, 0.0)
    g = float(gamma)
    if g == round(g) and 0.0 <= g <= 8.0:     # integer gamma -> plain multiplies
        w = jnp.ones_like(om)
        for _ in range(int(g)):
            w = w * om
    else:
        w = jnp.power(om, g)

    loss = jnp.where(valid, w * (-log_p_t), 0.0)                # (T, 1)

    # Accumulate into the resident (1, 1) output block; written back once at the end.
    out_ref[...] += alpha * jnp.sum(loss, axis=0, keepdims=True)


def _vmem_budget_bytes():
    """(budget for the 4 pipelined input buffers, scoped-VMEM limit), in bytes."""
    kind = ""
    try:
        kind = jax.devices()[0].device_kind.lower()
    except Exception:
        pass
    if "v5" in kind or "v6" in kind:
        # 128 MiB physical VMEM on v5e/v6e: allow bigger blocks (fewer grid steps).
        return 64 * 1024 * 1024, 96 * 1024 * 1024
    # Conservative default, safe on v7x (64 MiB physical / 32 MiB default scoped).
    return 24 * 1024 * 1024, 32 * 1024 * 1024


def focal_loss_kornia(y_pred: jax.Array, label: jax.Array,
                      alpha: float, gamma: float = 2.0,
                      max_tile_rows=None) -> jax.Array:
    """Matches FocalLossKornia(alpha, gamma, reduction='none')(y_pred, label)."""
    if y_pred.ndim == 1:                      # 1-D branch: single sample, C classes
        y_pred = y_pred[None, :]
        label = label[None, :]
    n, c = y_pred.shape
    assert label.shape == (n, c)

    itemsize = max(jnp.dtype(y_pred.dtype).itemsize, jnp.dtype(label.dtype).itemsize)
    sub = 8 * max(1, 4 // itemsize)           # sublane multiple: 8 f32 / 16 bf16 / 32 i8
    c_lanes = -(-c // 128) * 128              # class dim lane-pads to 128 in VMEM

    buf_budget, vmem_limit = _vmem_budget_bytes()
    # 2 inputs x 2 pipeline buffers resident in VMEM, each (tile, c_lanes) in-layout.
    vmem_cap = max(sub, (buf_budget // (4 * c_lanes * itemsize)) // sub * sub)
    # Large enough that each grid step moves a few MiB of real HBM bytes
    # (per-grid-step fixed overhead is ~0.35 us).
    want_rows = (4 * 1024 * 1024) // max(1, 2 * c * itemsize)
    want_rows = max(sub, -(-want_rows // sub) * sub)

    tile = min(vmem_cap, want_rows)
    tile = min(tile, -(-n // sub) * sub)      # never (much) bigger than the problem
    tile = max(tile, sub)
    if max_tile_rows is not None:             # test hook / manual override
        tile = max(sub, min(tile, (int(max_tile_rows) // sub) * sub))
    num_tiles = pl.cdiv(n, tile)

    kernel = functools.partial(_focal_loss_kernel, alpha=float(alpha),
                               gamma=float(gamma), tile_rows=tile)

    out = pl.pallas_call(
        kernel,
        out_shape=jax.ShapeDtypeStruct((1, 1), jnp.float32),
        grid_spec=pltpu.PrefetchScalarGridSpec(
            num_scalar_prefetch=1,            # n_valid lives in SMEM
            grid=(num_tiles,),
            in_specs=[
                pl.BlockSpec((tile, c), lambda i, n_ref: (i, 0)),
                pl.BlockSpec((tile, c), lambda i, n_ref: (i, 0)),
            ],
            out_specs=pl.BlockSpec((1, 1), lambda i, n_ref: (0, 0)),
        ),
        compiler_params=pltpu.CompilerParams(
            # Output is accumulated across the grid axis -> it is a reduction axis.
            # TODO(synk): explicit two-TensorCore sharding on v7x (CORE_PARALLEL axis
            # with one partial per core) if a profile shows one TC doing all tiles.
            dimension_semantics=("arbitrary",),
            vmem_limit_bytes=vmem_limit,
        ),
    )(jnp.full((1,), n, dtype=jnp.int32), y_pred, label)

    return out[0, 0]


def _reference(y_pred, label, alpha, gamma):
    if y_pred.ndim == 1:
        y_pred = y_pred[None, :]
        label = label[None, :]
    tgt = jnp.argmax(label, axis=1)
    log_p = jax.nn.log_softmax(y_pred.astype(jnp.float32), axis=1)
    p = jnp.exp(log_p)
    one_hot = jax.nn.one_hot(tgt, y_pred.shape[1], dtype=jnp.float32)
    focal = -alpha * jnp.power(1.0 - p, gamma) * log_p
    return jnp.sum(one_hot * focal)


if __name__ == "__main__":
    alpha, gamma = 0.25, 2.0
    key = jax.random.PRNGKey(0)
    k1, k2, k3, k4, k5, k6, k7, k8 = jax.random.split(key, 8)

    # Case 1: 2-D branch, single tile (batch=8, classes=32), f32.
    y1 = jax.random.normal(k1, (8, 32), dtype=jnp.float32)
    l1 = jax.random.uniform(k2, (8, 32), dtype=jnp.float32)
    out1 = jax.block_until_ready(focal_loss_kornia(y1, l1, alpha, gamma))
    ref1 = _reference(y1, l1, alpha, gamma)
    assert jnp.allclose(out1, ref1, rtol=1e-5, atol=1e-4), (out1, ref1)

    # Case 2: multi-tile accumulation + ragged (masked) last tile (batch=300, C=10).
    y2 = jax.random.normal(k3, (300, 10), dtype=jnp.float32)
    l2 = jax.random.uniform(k4, (300, 10), dtype=jnp.float32)
    out2 = jax.block_until_ready(
        focal_loss_kornia(y2, l2, alpha, gamma, max_tile_rows=128))
    ref2 = _reference(y2, l2, alpha, gamma)
    assert jnp.allclose(out2, ref2, rtol=1e-5, atol=1e-4), (out2, ref2)

    # Case 3: 1-D branch (single sample, 16 classes).
    y3 = jax.random.normal(k5, (16,), dtype=jnp.float32)
    l3 = jax.random.uniform(k6, (16,), dtype=jnp.float32)
    out3 = jax.block_until_ready(focal_loss_kornia(y3, l3, alpha, gamma))
    ref3 = _reference(y3, l3, alpha, gamma)
    assert jnp.allclose(out3, ref3, rtol=1e-5, atol=1e-4), (out3, ref3)

    # Case 4: native bf16 inputs (no wrapper upcast; kernel casts tiles in VMEM).
    y4 = jax.random.normal(k7, (64, 20), dtype=jnp.bfloat16)
    l4 = jax.random.uniform(k8, (64, 20), dtype=jnp.bfloat16)
    out4 = jax.block_until_ready(focal_loss_kornia(y4, l4, alpha, gamma))
    ref4 = _reference(y4, l4, alpha, gamma)
    assert jnp.allclose(out4, ref4, rtol=1e-5, atol=1e-4), (out4, ref4)

    print("KERNEL_OK")
</pallas_src>

<mosaic_0001>
module attributes {stable_mosaic.version = 11 : i64} {
  func.func @_focal_loss_kernel(%arg0: i32, %arg1: memref<1xi32, #tpu.memory_space<smem>>, %arg2: memref<8x32xf32, #tpu.memory_space<vmem>>, %arg3: memref<8x32xf32, #tpu.memory_space<vmem>>, %arg4: memref<1x1xf32, #tpu.memory_space<vmem>>) attributes {dimension_semantics = [#tpu.dimension_semantics<arbitrary>], iteration_bounds = array<i64: 1>, scalar_prefetch = 1 : i64, scratch_operands = 0 : i64, tpu.core_type = #tpu.core_type<tc>, window_params = [{transform_indices = @transform_0, window_bounds = array<i64: 8, 32>}, {transform_indices = @transform_1, window_bounds = array<i64: 8, 32>}, {pipeline_mode = #tpu.pipeline_mode<synchronous>, transform_indices = @transform_2, window_bounds = array<i64: 1, 1>}]} {
    %c0_i32 = arith.constant 0 : i32
    %0 = arith.cmpi eq, %arg0, %c0_i32 : i32
    %1 = arith.extui %0 : i1 to i32
    %c0_i32_0 = arith.constant 0 : i32
    %2 = arith.cmpi ne, %1, %c0_i32_0 : i32
    scf.if %2 {
      %cst_23 = arith.constant 0.000000e+00 : f32
      %64 = vector.broadcast %cst_23 : f32 to vector<1x1xf32>
      %c0_24 = arith.constant 0 : index
      %c0_25 = arith.constant 0 : index
      %65 = vector.load %arg4[%c0_24, %c0_25] : memref<1x1xf32, #tpu.memory_space<vmem>>, vector<1x1xf32>
      tpu.vector_store %arg4[%c0_24, %c0_25], %64 {strides = array<i32>} : memref<1x1xf32, #tpu.memory_space<vmem>>, vector<1x1xf32>,
    } else {
    }
    %c0 = arith.constant 0 : index
    %c0_1 = arith.constant 0 : index
    %3 = vector.load %arg2[%c0, %c0_1] : memref<8x32xf32, #tpu.memory_space<vmem>>, vector<8x32xf32>
    %c0_2 = arith.constant 0 : index
    %c0_3 = arith.constant 0 : index
    %4 = vector.load %arg3[%c0_2, %c0_3] : memref<8x32xf32, #tpu.memory_space<vmem>>, vector<8x32xf32>
    %c8_i32 = arith.constant 8 : i32
    %5 = arith.muli %arg0, %c8_i32 : i32
    %6 = tpu.iota {dimensions = array<i32: 0>} : vector<8x1xi32>
    %7 = vector.broadcast %5 : i32 to vector<8x1xi32>
    %8 = arith.addi %7, %6 : vector<8x1xi32>
    %c0_4 = arith.constant 0 : index
    %9 = memref.load %arg1[%c0_4] : memref<1xi32, #tpu.memory_space<smem>>
    %10 = vector.broadcast %9 : i32 to vector<8x1xi32>
    %11 = arith.cmpi slt, %8, %10 : vector<8x1xi32>
    %cst = arith.constant 0.000000e+00 : f32
    %12 = vector.shape_cast %11 : vector<8x1xi1> to vector<8x1xi1>
    %13 = vector.broadcast %12 : vector<8x1xi1> to vector<8x32xi1>
    %14 = vector.broadcast %cst : f32 to vector<8x32xf32>
    %15 = arith.select %13, %3, %14 : vector<8x32xi1>, vector<8x32xf32>
    %cst_5 = arith.constant 0.000000e+00 : f32
    %16 = vector.shape_cast %11 : vector<8x1xi1> to vector<8x1xi1>
    %17 = vector.broadcast %16 : vector<8x1xi1> to vector<8x32xi1>
    %18 = vector.broadcast %cst_5 : f32 to vector<8x32xf32>
    %19 = arith.select %17, %4, %18 : vector<8x32xi1>, vector<8x32xf32>
    %20 = tpu.iota {dimensions = array<i32: 1>} : vector<8x32xi32>
    %cst_6 = arith.constant dense<0xFF800000> : vector<8xf32>
    %21 = vector.multi_reduction <maximumf>, %19, %cst_6 [1] : vector<8x32xf32> to vector<8xf32>
    %22 = vector.shape_cast %21 : vector<8xf32> to vector<8x1xf32>
    %23 = vector.broadcast %22 : vector<8x1xf32> to vector<8x32xf32>
    %24 = arith.cmpf oeq, %19, %23 : vector<8x32xf32>
    %c32_i32 = arith.constant 32 : i32
    %25 = vector.broadcast %c32_i32 : i32 to vector<8x32xi32>
    %26 = arith.select %24, %20, %25 : vector<8x32xi1>, vector<8x32xi32>
    %cst_7 = arith.constant dense<2147483647> : vector<8xi32>
    %27 = vector.multi_reduction <minsi>, %26, %cst_7 [1] : vector<8x32xi32> to vector<8xi32>
    %28 = vector.shape_cast %27 : vector<8xi32> to vector<8x1xi32>
    %cst_8 = arith.constant dense<0xFF800000> : vector<8xf32>
    %29 = vector.multi_reduction <maximumf>, %15, %cst_8 [1] : vector<8x32xf32> to vector<8xf32>
    %30 = vector.shape_cast %29 : vector<8xf32> to vector<8x1xf32>
    %31 = vector.broadcast %30 : vector<8x1xf32> to vector<8x32xf32>
    %32 = arith.subf %15, %31 : vector<8x32xf32>
    %33 = math.exp %32 : vector<8x32xf32>
    %cst_9 = arith.constant dense<0.000000e+00> : vector<8xf32>
    %34 = vector.multi_reduction <add>, %33, %cst_9 [1] : vector<8x32xf32> to vector<8xf32>
    %35 = vector.shape_cast %34 : vector<8xf32> to vector<8x1xf32>
    %36 = vector.broadcast %28 : vector<8x1xi32> to vector<8x32xi32>
    %37 = arith.cmpi eq, %20, %36 : vector<8x32xi32>
    %cst_10 = arith.constant 0.000000e+00 : f32
    %38 = vector.broadcast %cst_10 : f32 to vector<8x32xf32>
    %39 = arith.select %37, %32, %38 : vector<8x32xi1>, vector<8x32xf32>
    %cst_11 = arith.constant dense<0.000000e+00> : vector<8xf32>
    %40 = vector.multi_reduction <add>, %39, %cst_11 [1] : vector<8x32xf32> to vector<8xf32>
    %41 = vector.shape_cast %40 : vector<8xf32> to vector<8x1xf32>
    %42 = math.log %35 : vector<8x1xf32>
    %43 = arith.subf %41, %42 : vector<8x1xf32>
    %44 = math.exp %43 : vector<8x1xf32>
    %cst_12 = arith.constant 1.000000e+00 : f32
    %45 = vector.broadcast %cst_12 : f32 to vector<8x1xf32>
    %46 = arith.subf %45, %44 : vector<8x1xf32>
    %cst_13 = arith.constant 0.000000e+00 : f32
    %47 = vector.broadcast %cst_13 : f32 to vector<8x1xf32>
    %48 = arith.maximumf %46, %47 : vector<8x1xf32>
    %cst_14 = arith.constant 1.000000e+00 : f32
    %49 = vector.broadcast %cst_14 : f32 to vector<8x1xf32>
    %50 = arith.mulf %49, %48 : vector<8x1xf32>
    %51 = arith.mulf %50, %48 : vector<8x1xf32>
    %cst_15 = arith.constant 0.000000e+00 : f32
    %52 = vector.broadcast %cst_15 : f32 to vector<8x1xf32>
    %53 = arith.subf %52, %43 : vector<8x1xf32>
    %54 = arith.mulf %51, %53 : vector<8x1xf32>
    %cst_16 = arith.constant 0.000000e+00 : f32
    %55 = vector.broadcast %cst_16 : f32 to vector<8x1xf32>
    %56 = arith.select %11, %54, %55 : vector<8x1xi1>, vector<8x1xf32>
    %c0_17 = arith.constant 0 : index
    %c0_18 = arith.constant 0 : index
    %57 = vector.load %arg4[%c0_17, %c0_18] : memref<1x1xf32, #tpu.memory_space<vmem>>, vector<1x1xf32>
    %cst_19 = arith.constant dense<0.000000e+00> : vector<1xf32>
    %58 = vector.multi_reduction <add>, %56, %cst_19 [0] : vector<8x1xf32> to vector<1xf32>
    %59 = vector.shape_cast %58 : vector<1xf32> to vector<1x1xf32>
    %cst_20 = arith.constant 2.500000e-01 : f32
    %60 = vector.broadcast %cst_20 : f32 to vector<1x1xf32>
    %61 = arith.mulf %60, %59 : vector<1x1xf32>
    %62 = arith.addf %57, %61 : vector<1x1xf32>
    %c0_21 = arith.constant 0 : index
    %c0_22 = arith.constant 0 : index
    %63 = vector.load %arg4[%c0_21, %c0_22] : memref<1x1xf32, #tpu.memory_space<vmem>>, vector<1x1xf32>
    tpu.vector_store %arg4[%c0_21, %c0_22], %62 {strides = array<i32>} : memref<1x1xf32, #tpu.memory_space<vmem>>, vector<1x1xf32>,
    return
  }
  func.func @transform_0(%arg0: i32, %arg1: memref<1xi32, #tpu.memory_space<smem>>) -> (i32, i32) {
    %c0_i32 = arith.constant 0 : i32
    %c0_i32_0 = arith.constant 0 : i32
    return %arg0, %c0_i32 : i32, i32
  }
  func.func @transform_1(%arg0: i32, %arg1: memref<1xi32, #tpu.memory_space<smem>>) -> (i32, i32) {
    %c0_i32 = arith.constant 0 : i32
    %c0_i32_0 = arith.constant 0 : i32
    return %arg0, %c0_i32 : i32, i32
  }
  func.func @transform_2(%arg0: i32, %arg1: memref<1xi32, #tpu.memory_space<smem>>) -> (i32, i32) {
    %c0_i32 = arith.constant 0 : i32
    %c0_i32_0 = arith.constant 0 : i32
    %c0_i32_1 = arith.constant 0 : i32
    return %c0_i32, %c0_i32_0 : i32, i32
  }
}

</mosaic_0001>

<llo_original>
// kernel: tpu_custom_call.1
$region0: #{tpu_custom_call.1}
  #allocation0 [shape = 'u32[]', space=smem, size = 0x4, offset = 0x4, fixed_abs, tag = 'smem constant byte address 0x4 - core index']
  #allocation1 [shape = 'u32[144,128]{1,0:T(1,128)}', space=vmem, size = 0x12000, scoped, tag = 'internal scratch']
  #allocation2 [shape = 's32[1]{0}', space=sflag, size = 0x4, scoped, tag = 'scoped memory for tpu_custom_call.1']
  #allocation3 [shape = 's32[1]{0:T(128)S(6)}', space=smem, size = 0x200, scoped, tag = 'prefetched SMEM operand 0']
  %s0 = inlined_call_operand.<no memory space> [shape: s32[1], index: 0, kind: input, shape index: {}]
  %s1 = inlined_call_operand.hbm [shape: f32[8,32], index: 1, kind: input, shape index: {}]
  %s2 = inlined_call_operand.hbm [shape: f32[8,32], index: 2, kind: input, shape index: {}]
  %s3 = inlined_call_operand.hbm [shape: f32[1,1], index: 3, kind: output, shape index: {}]
  %s4 = sld [smem:[#allocation0]]
  $region30: #{tpu_custom_call.1} parent=0
    _
  %s6 = ssub.s32 1, %s4
  %s7 = scalar_select 0, %s6, %s4
  %8 = sst [smem:[#allocation3]] %s0
  $region1: #{tpu_custom_call.1} parent=0
    #allocation4 [shape = 'u8[4096]{0}', space=vmem, size = 0x1000, scoped, tag = 'input window, operand 1, single buffered']
    #allocation5 [shape = 's32[1]{0}', space=sflag, size = 0x4, scoped, tag = 'scoped memory for tpu_custom_call.1']
    #allocation6 [shape = 's32[1]{0}', space=sflag, size = 0x4, scoped, tag = 'scoped memory for tpu_custom_call.1']
    #allocation7 [shape = 'u8[4096]{0}', space=vmem, size = 0x1000, scoped, tag = 'input window, operand 2, single buffered']
    #allocation8 [shape = 's32[1]{0}', space=sflag, size = 0x4, scoped, tag = 'scoped memory for tpu_custom_call.1']
    #allocation9 [shape = 'u8[512]{0}', space=vmem, size = 0x400, scoped, tag = 'output window, operand 0, single buffered']
    %9 = vsyncpa [#allocation5], 0
    %10 = vsyncpa [#allocation8], 0
    %11 = vsyncpa [#allocation6], 0
    // Predicated region
    $region2: #{tpu_custom_call.1} parent=1 // pred_check
      _
    $region3: #{tpu_custom_call.1} parent=1 // pred_check_branch
      %13 = sbr.rel (0) target = $region5
    $region4: #{tpu_custom_call.1} parent=1 // pred_region
      %s15 = ssub.s32 128, 128
      %16 = vsyncadd [#allocation5], %s15
      %s18 = sshll.u32 [#allocation4], 4
      %s19 = int_to_ptr.vmem [resolvable:$true] %s18
      %21 = dma.hbm_to_vmem [thread:$0]  %s1, 128, %s19, [#allocation5]
    $region5: #{tpu_custom_call.1} parent=1 // pred_fallthru
      _
    // Predicated region
    $region6: #{tpu_custom_call.1} parent=1 // pred_check
      _
    $region7: #{tpu_custom_call.1} parent=1 // pred_check_branch
      %23 = sbr.rel (0) target = $region9
    $region8: #{tpu_custom_call.1} parent=1 // pred_region
      %s25 = ssub.s32 128, 128
      %26 = vsyncadd [#allocation8], %s25
      %s28 = sshll.u32 [#allocation7], 4
      %s29 = int_to_ptr.vmem [resolvable:$true] %s28
      %31 = dma.hbm_to_vmem [thread:$0]  %s2, 128, %s29, [#allocation8]
    $region9: #{tpu_custom_call.1} parent=1 // pred_fallthru
      _
    // Predicated region
    $region10: #{tpu_custom_call.1} parent=1 // pred_check
      _
    $region11: #{tpu_custom_call.1} parent=1 // pred_check_branch
      %33 = sbr.rel (0) target = $region13
    $region12: #{tpu_custom_call.1} parent=1 // pred_region
      %34 = dma.done [#allocation5], 128
    $region13: #{tpu_custom_call.1} parent=1 // pred_fallthru
      _
    // Predicated region
    $region14: #{tpu_custom_call.1} parent=1 // pred_check
      _
    $region15: #{tpu_custom_call.1} parent=1 // pred_check_branch
      %36 = sbr.rel (0) target = $region17
    $region16: #{tpu_custom_call.1} parent=1 // pred_region
      %37 = dma.done [#allocation8], 128
    $region17: #{tpu_custom_call.1} parent=1 // pred_fallthru
      _
    %p38 = scmp.eq.s32.totalorder 0, 0
    // Predicated region
    $region18: #{tpu_custom_call.1} parent=1 // pred_check
      %p39 = pneg %p38
    $region19: #{tpu_custom_call.1} parent=1 // pred_check_branch
      %41 = sbr.rel (%p39) target = $region21
    $region20: #{tpu_custom_call.1} parent=1 // pred_region
      %vm42 = vcmask 0
      %43 = vst.msk [vmem:[#allocation9] sm:$0x1] %vm42, 0.0
    $region21: #{tpu_custom_call.1} parent=1 // pred_fallthru
      _
    %v44 = vld [vmem:[#allocation4] sm:$0xff]
    %v45 = vld [vmem:[#allocation7] sm:$0xff]
    %s46 = smul.u32 0, 8
    %v47 = vlaneseq
    %v48 = vshrl.u32 %v47, 7
    %v49 = vstv %s46
    %v50 = vadd.s32 %v49, %v48
    %s51 = sld [smem:[#allocation3]]
    %v52 = vstv %s51
    %vm53 = vcmp.lt.s32.totalorder %v50, %v52
    %v54 = vsel %vm53, 1, 0
    %vm55 = vcmp.eq.s32.totalorder %v54, 1
    %v56 = vsel %vm55, %v44, 0.0
    %v57 = vsel %vm55, %v45, 0.0
    %v58 = vlaneseq
    %v59 = vand.u32 %v58, 127
    %vm60 = vcmask 261120
    %v61 = vsel %vm60, %v57, -inf
    %62 = vmax.xlane.f32.xlu0 %v61
    %v63 = vpop.xlane.xlu0 %62
    %vm64 = vcmp.eq.f32.partialorder %v57, %v63
    %v65 = vsel %vm64, %v59, 32
    %v66 = vsel %vm60, %v65, 2147483647
    %v67 = vand.u32 %v66, 65535
    %v68 = vshra.s32 %v66, 16
    %v69 = vcvt.s32.f32 %v67
    %v70 = vcvt.s32.f32 %v68
    %71 = vmin.xlane.f32.xlu0 %v70
    %v72 = vpop.xlane.xlu0 %71
    %vm73 = vcmp.eq.f32.partialorder %v70, %v72
    %v74 = vsel %vm73, %v69, inf
    %75 = vmin.xlane.f32.xlu0 %v74
    %v76 = vpop.xlane.xlu0 %75
    %v77 = vcvt.f32.s32 %v76
    %v78 = vcvt.f32.s32 %v72
    %v79 = vshll.u32 %v78, 16
    %v80 = vadd.s32 %v79, %v77
    %v81 = vsel %vm60, %v56, -inf
    %82 = vmax.xlane.f32.xlu0 %v81
    %v83 = vpop.xlane.xlu0 %82
    %v84 = vsub.f32 %v56, %v83
    %v85 = vmul.f32 %v84, 1.442695
    %v86 = vpow.pop %v85
    %v87 = vsel %vm60, %v86, 0.0
    %88 = vadd.xlane.f32.xlu0 %v87
    %v89 = vpop.xlane.xlu0 %88
    %vm90 = vcmp.eq.s32.totalorder %v59, %v80
    %v91 = vsel %vm90, %v84, 0.0
    %v92 = vsel %vm60, %v91, 0.0
    %93 = vadd.xlane.f32.xlu0 %v92
    %v94 = vpop.xlane.xlu0 %93
    %v95 = vlog2.pop %v89
    %v96 = vmul.f32 %v95, 0.6931472
    %v97 = vsub.f32 %v94, %v96
    %v98 = vmul.f32 %v97, 1.442695
    %v99 = vpow.pop %v98
    %v100 = vsub.f32 1.0, %v99
    %v101 = vmax.f32 %v100, 0.0
    %v102 = vmul.f32 %v101, %v101
    %v103 = vsub.f32 0.0, %v97
    %v104 = vmul.f32 %v102, %v103
    %v105 = vsel %vm53, %v104, 0.0
    %v106 = vld [vmem:[#allocation9] sm:$0x1]
    %v107 = vrot.slane %v105, 4
    %v108 = vadd.f32 %v105, %v107
    %v109 = vrot.slane %v108, 2
    %v110 = vadd.f32 %v108, %v109
    %v111 = vrot.slane %v110, 1
    %v112 = vadd.f32 %v110, %v111
    %v113 = vmul.f32 %v112, 0.25
    %v114 = vadd.f32 %v106, %v113
    %vm115 = vcmask 0
    %116 = vst.msk [vmem:[#allocation9] sm:$0x1] %vm115, %v114
    // Predicated region
    $region22: #{tpu_custom_call.1} parent=1 // pred_check
      _
    $region23: #{tpu_custom_call.1} parent=1 // pred_check_branch
      %118 = sbr.rel (0) target = $region25
    $region24: #{tpu_custom_call.1} parent=1 // pred_region
      %s120 = ssub.s32 16, 16
      %121 = vsyncadd [#allocation6], %s120
      %s123 = sshll.u32 [#allocation9], 4
      %s124 = int_to_ptr.vmem [resolvable:$true] %s123
      %126 = dma.vmem_to_hbm [thread:$0]  %s124, 16, %s3, [#allocation6]
    $region25: #{tpu_custom_call.1} parent=1 // pred_fallthru
      _
    // Predicated region
    $region26: #{tpu_custom_call.1} parent=1 // pred_check
      _
    $region27: #{tpu_custom_call.1} parent=1 // pred_check_branch
      %128 = sbr.rel (0) target = $region29
    $region28: #{tpu_custom_call.1} parent=1 // pred_region
      %129 = dma.done [#allocation6], 16
    $region29: #{tpu_custom_call.1} parent=1 // pred_fallthru
      _
    %130 = vsyncpa [#allocation5], 1
    %131 = vsyncpa [#allocation8], 1
    %132 = vsyncpa [#allocation6], 1

</llo_original>
